<compile_context>
chip_gen: v6e
topology: v6e:2x2x1
jax: 0.10.0
libtpu: 0.0.40
codegen_flags: <defaults>
</compile_context>

<pallas_src>
import functools

import jax
import jax.numpy as jnp
from jax.experimental import pallas as pl
from jax.experimental.pallas import tpu as pltpu


def _sobel_loss_kernel(m_ref, p_ref, g_ref, o_ref, *, H, W):
    """One block: (TB, H*W) rows, each row is one flattened (H, W) image."""
    HW = H * W

    # Linearity of the Sobel filter: sobel(pred) - sobel(gt) == sobel(pred-gt).
    D = p_ref[...] - g_ref[...]                                   # (TB, HW)

    # Precomputed zero-padding masks (block index constant -> VMEM resident).
    ml = m_ref[0:1, :]          # 0 where col == 0      (left-neighbour pad)
    mr = m_ref[1:2, :]          # 0 where col == W - 1  (right-neighbour pad)
    mu = m_ref[2:3, :]          # 0 where row == 0      (upper-neighbour pad)
    md = m_ref[3:4, :]          # 0 where row == H - 1  (lower-neighbour pad)

    # Horizontal (+/-1 column) neighbours: lane rotation (XLU) + mask multiply.
    # roll(x, s) puts x[p - s] at position p; wrap-around lanes are zeroed.
    left = ml * pltpu.roll(D, 1, 1)                               # D[h, w-1]
    right = mr * pltpu.roll(D, HW - 1, 1)                         # D[h, w+1]

    # Shared row-wise partial sums for both stencils:
    #   kernelX = [[1,0,-1],[2,0,-2],[1,0,-1]] -> sx = clr[h-1] + 2*clr[h] + clr[h+1]
    #   kernelY = kernelX.T                    -> sy = cs[h-1]  - cs[h+1]
    cs = left + 2.0 * D + right           # A[h,w-1] + 2*A[h,w] + A[h,w+1]
    clr = left - right                    # A[h,w-1] - A[h,w+1]

    # Y-stencil first, folded into |.|, then X-stencil: fewer live block temps.
    sy = mu * pltpu.roll(cs, W, 1) - md * pltpu.roll(cs, HW - W, 1)
    acc = jnp.abs(sy)

    sx = (mu * pltpu.roll(clr, W, 1) + 2.0 * clr
          + md * pltpu.roll(clr, HW - W, 1))
    o_ref[...] = acc + jnp.abs(sx)


def _vmem_plan():
    """(per-input-buffer block bytes, vmem_limit_bytes) per TPU generation."""
    try:
        cap = pltpu.get_tpu_info().vmem_capacity_bytes
    except Exception:
        cap = 64 << 20                       # conservative fallback (v7x per-TC)
    if cap >= (100 << 20):                   # v5e / v6e: 128 MiB physical VMEM
        return 4 << 20, 80 << 20
    return 2 << 20, 48 << 20                 # v7x: 64 MiB per TensorCore


def _choose_block_rows(B, HW, itemsize, target_bytes):
    """Images per block: ~target bytes per buffer, (8,128)-legal, >=~8 steps."""
    if B <= 8:
        return B                             # full extent -> always legal
    tb = max(8, target_bytes // max(1, HW * itemsize))
    # Keep at least ~8 grid steps: the pipeline needs a steady state and both
    # v7x TensorCores should each get several blocks.
    tb = min(tb, max(8, (B // 8 // 8) * 8))
    tb = max(8, (tb // 8) * 8)               # sublane multiple of 8
    return min(tb, B)


def sobel_loss(pred, gt):
    """Pallas implementation of SOBEL.forward(pred, gt).

    pred, gt: (N, C, H, W) float32.  Returns (N*C, 1, H, W) float32.
    """
    N, C, H, W = pred.shape
    B = N * C
    HW = H * W
    p = pred.reshape(B, HW)   # contiguous reshape: no HBM copy
    g = gt.reshape(B, HW)

    # Zero-padding masks for the 3x3 stencil, built once (4*HW*4 bytes).
    pos = jnp.arange(HW, dtype=jnp.int32)
    col, row = pos % W, pos // W
    masks = jnp.stack(
        [col > 0, col < W - 1, row > 0, row < H - 1]).astype(pred.dtype)

    target_bytes, vmem_limit = _vmem_plan()
    tb = _choose_block_rows(B, HW, jnp.dtype(pred.dtype).itemsize, target_bytes)
    grid = (pl.cdiv(B, tb),)

    kernel = functools.partial(_sobel_loss_kernel, H=H, W=W)
    out = pl.pallas_call(
        kernel,
        out_shape=jax.ShapeDtypeStruct((B, HW), pred.dtype),
        grid=grid,
        in_specs=[
            pl.BlockSpec((4, HW), lambda b: (0, 0)),    # masks: stay resident
            pl.BlockSpec((tb, HW), lambda b: (b, 0)),
            pl.BlockSpec((tb, HW), lambda b: (b, 0)),
        ],
        out_specs=pl.BlockSpec((tb, HW), lambda b: (b, 0)),
        compiler_params=pltpu.CompilerParams(
            dimension_semantics=("parallel",),
            vmem_limit_bytes=vmem_limit,
        ),
    )(masks, p, g)
    return out.reshape(B, 1, H, W)


def _reference(pred, gt):
    """Plain-JAX reference (same math as torch F.conv2d with sobel kernels)."""
    N, C, H, W = pred.shape
    kx = jnp.array([[1., 0., -1.], [2., 0., -2.], [1., 0., -1.]], jnp.float32)
    ky = kx.T

    def conv(img, k):  # img: (B, H, W), zero padding = 1
        a = jnp.pad(img, ((0, 0), (1, 1), (1, 1)))
        out = jnp.zeros_like(img)
        for i in range(3):
            for j in range(3):
                out = out + k[i, j] * a[:, i:i + H, j:j + W]
        return out

    p = pred.reshape(N * C, H, W)
    g = gt.reshape(N * C, H, W)
    loss = (jnp.abs(conv(p, kx) - conv(g, kx))
            + jnp.abs(conv(p, ky) - conv(g, ky)))
    return loss.reshape(N * C, 1, H, W)


if __name__ == "__main__":
    key = jax.random.PRNGKey(0)
    k1, k2 = jax.random.split(key)
    N, C, H, W = 2, 4, 16, 16
    pred = jax.random.normal(k1, (N, C, H, W), dtype=jnp.float32)
    gt = jax.random.normal(k2, (N, C, H, W), dtype=jnp.float32)

    loss = jax.jit(sobel_loss)(pred, gt)
    loss = jax.block_until_ready(loss)

    ref = _reference(pred, gt)
    assert loss.shape == (N * C, 1, H, W), loss.shape
    assert jnp.allclose(loss, ref, atol=1e-5, rtol=1e-5), "mismatch vs reference"
    print("KERNEL_OK")
</pallas_src>

<mosaic_0001>
module attributes {stable_mosaic.version = 11 : i64} {
  func.func @_sobel_loss_kernel(%arg0: i32, %arg1: memref<4x256xf32, #tpu.memory_space<vmem>>, %arg2: memref<8x256xf32, #tpu.memory_space<vmem>>, %arg3: memref<8x256xf32, #tpu.memory_space<vmem>>, %arg4: memref<8x256xf32, #tpu.memory_space<vmem>>) attributes {dimension_semantics = [#tpu.dimension_semantics<parallel>], iteration_bounds = array<i64: 1>, scalar_prefetch = 0 : i64, scratch_operands = 0 : i64, tpu.core_type = #tpu.core_type<tc>, window_params = [{pipeline_mode = #tpu.pipeline_mode<synchronous>, transform_indices = @transform_0, window_bounds = array<i64: 4, 256>}, {transform_indices = @transform_1, window_bounds = array<i64: 8, 256>}, {transform_indices = @transform_2, window_bounds = array<i64: 8, 256>}, {transform_indices = @transform_3, window_bounds = array<i64: 8, 256>}]} {
    %c0 = arith.constant 0 : index
    %c0_0 = arith.constant 0 : index
    %0 = vector.load %arg2[%c0, %c0_0] : memref<8x256xf32, #tpu.memory_space<vmem>>, vector<8x256xf32>
    %c0_1 = arith.constant 0 : index
    %c0_2 = arith.constant 0 : index
    %1 = vector.load %arg3[%c0_1, %c0_2] : memref<8x256xf32, #tpu.memory_space<vmem>>, vector<8x256xf32>
    %2 = arith.subf %0, %1 : vector<8x256xf32>
    %c0_3 = arith.constant 0 : index
    %c0_4 = arith.constant 0 : index
    %3 = vector.load %arg1[%c0_3, %c0_4] : memref<4x256xf32, #tpu.memory_space<vmem>>, vector<1x256xf32>
    %c1 = arith.constant 1 : index
    %c0_5 = arith.constant 0 : index
    %4 = vector.load %arg1[%c1, %c0_5] : memref<4x256xf32, #tpu.memory_space<vmem>>, vector<1x256xf32>
    %c2 = arith.constant 2 : index
    %c0_6 = arith.constant 0 : index
    %5 = vector.load %arg1[%c2, %c0_6] : memref<4x256xf32, #tpu.memory_space<vmem>>, vector<1x256xf32>
    %c3 = arith.constant 3 : index
    %c0_7 = arith.constant 0 : index
    %6 = vector.load %arg1[%c3, %c0_7] : memref<4x256xf32, #tpu.memory_space<vmem>>, vector<1x256xf32>
    %c1_i32 = arith.constant 1 : i32
    %7 = tpu.dynamic_rotate %2 by %c1_i32 dim 1 : vector<8x256xf32>, i32 -> vector<8x256xf32>
    %8 = vector.broadcast %3 : vector<1x256xf32> to vector<8x256xf32>
    %9 = arith.mulf %8, %7 : vector<8x256xf32>
    %c255_i32 = arith.constant 255 : i32
    %10 = tpu.dynamic_rotate %2 by %c255_i32 dim 1 : vector<8x256xf32>, i32 -> vector<8x256xf32>
    %11 = vector.broadcast %4 : vector<1x256xf32> to vector<8x256xf32>
    %12 = arith.mulf %11, %10 : vector<8x256xf32>
    %cst = arith.constant 2.000000e+00 : f32
    %13 = vector.broadcast %cst : f32 to vector<8x256xf32>
    %14 = arith.mulf %13, %2 : vector<8x256xf32>
    %15 = arith.addf %9, %14 : vector<8x256xf32>
    %16 = arith.addf %15, %12 : vector<8x256xf32>
    %17 = arith.subf %9, %12 : vector<8x256xf32>
    %c16_i32 = arith.constant 16 : i32
    %18 = tpu.dynamic_rotate %16 by %c16_i32 dim 1 : vector<8x256xf32>, i32 -> vector<8x256xf32>
    %19 = vector.broadcast %5 : vector<1x256xf32> to vector<8x256xf32>
    %20 = arith.mulf %19, %18 : vector<8x256xf32>
    %c240_i32 = arith.constant 240 : i32
    %21 = tpu.dynamic_rotate %16 by %c240_i32 dim 1 : vector<8x256xf32>, i32 -> vector<8x256xf32>
    %22 = vector.broadcast %6 : vector<1x256xf32> to vector<8x256xf32>
    %23 = arith.mulf %22, %21 : vector<8x256xf32>
    %24 = arith.subf %20, %23 : vector<8x256xf32>
    %25 = math.absf %24 : vector<8x256xf32>
    %c16_i32_8 = arith.constant 16 : i32
    %26 = tpu.dynamic_rotate %17 by %c16_i32_8 dim 1 : vector<8x256xf32>, i32 -> vector<8x256xf32>
    %27 = vector.broadcast %5 : vector<1x256xf32> to vector<8x256xf32>
    %28 = arith.mulf %27, %26 : vector<8x256xf32>
    %cst_9 = arith.constant 2.000000e+00 : f32
    %29 = vector.broadcast %cst_9 : f32 to vector<8x256xf32>
    %30 = arith.mulf %29, %17 : vector<8x256xf32>
    %31 = arith.addf %28, %30 : vector<8x256xf32>
    %c240_i32_10 = arith.constant 240 : i32
    %32 = tpu.dynamic_rotate %17 by %c240_i32_10 dim 1 : vector<8x256xf32>, i32 -> vector<8x256xf32>
    %33 = vector.broadcast %6 : vector<1x256xf32> to vector<8x256xf32>
    %34 = arith.mulf %33, %32 : vector<8x256xf32>
    %35 = arith.addf %31, %34 : vector<8x256xf32>
    %36 = math.absf %35 : vector<8x256xf32>
    %37 = arith.addf %25, %36 : vector<8x256xf32>
    %c0_11 = arith.constant 0 : index
    %c0_12 = arith.constant 0 : index
    %38 = vector.load %arg4[%c0_11, %c0_12] : memref<8x256xf32, #tpu.memory_space<vmem>>, vector<8x256xf32>
    tpu.vector_store %arg4[%c0_11, %c0_12], %37 {strides = array<i32>} : memref<8x256xf32, #tpu.memory_space<vmem>>, vector<8x256xf32>,
    return
  }
  func.func @transform_0(%arg0: i32) -> (i32, i32) {
    %c0_i32 = arith.constant 0 : i32
    %c0_i32_0 = arith.constant 0 : i32
    %c0_i32_1 = arith.constant 0 : i32
    return %c0_i32, %c0_i32_0 : i32, i32
  }
  func.func @transform_1(%arg0: i32) -> (i32, i32) {
    %c0_i32 = arith.constant 0 : i32
    %c0_i32_0 = arith.constant 0 : i32
    return %arg0, %c0_i32 : i32, i32
  }
  func.func @transform_2(%arg0: i32) -> (i32, i32) {
    %c0_i32 = arith.constant 0 : i32
    %c0_i32_0 = arith.constant 0 : i32
    return %arg0, %c0_i32 : i32, i32
  }
  func.func @transform_3(%arg0: i32) -> (i32, i32) {
    %c0_i32 = arith.constant 0 : i32
    %c0_i32_0 = arith.constant 0 : i32
    return %arg0, %c0_i32 : i32, i32
  }
}

</mosaic_0001>

<llo_original>
// kernel: sobel_loss.1
$region0: #{sobel_loss.1}
  #allocation0 [shape = 'u32[]', space=smem, size = 0x4, offset = 0x4, fixed_abs, tag = 'smem constant byte address 0x4 - core index']
  #allocation1 [shape = 'u32[144,128]{1,0:T(1,128)}', space=vmem, size = 0x12000, scoped, tag = 'internal scratch']
  %s0 = inlined_call_operand.vmem [shape: f32[4,256], index: 0, kind: input, shape index: {}]
  %s1 = inlined_call_operand.vmem [shape: f32[8,256], index: 1, kind: input, shape index: {}]
  %s2 = inlined_call_operand.vmem [shape: f32[8,256], index: 2, kind: input, shape index: {}]
  %s3 = inlined_call_operand.vmem [shape: f32[8,256], index: 3, kind: output, shape index: {}]
  %s4 = sld [smem:[#allocation0]]
  $region22: #{sobel_loss.1} parent=0
    _
  %s6 = ssub.s32 1, %s4
  %s7 = scalar_select 0, %s6, %s4
  // Predicated region
  $region2: #{sobel_loss.1} parent=0 // pred_check
    _
  $region3: #{sobel_loss.1} parent=0 // pred_check_branch
    %9 = sbr.rel (0) target = $region5
  $region4: #{sobel_loss.1} parent=0 // pred_region
    _
  $region5: #{sobel_loss.1} parent=0 // pred_fallthru
    _
  // Predicated region
  $region6: #{sobel_loss.1} parent=0 // pred_check
    _
  $region7: #{sobel_loss.1} parent=0 // pred_check_branch
    %11 = sbr.rel (0) target = $region9
  $region8: #{sobel_loss.1} parent=0 // pred_region
    _
  $region9: #{sobel_loss.1} parent=0 // pred_fallthru
    _
  // Predicated region
  $region10: #{sobel_loss.1} parent=0 // pred_check
    _
  $region11: #{sobel_loss.1} parent=0 // pred_check_branch
    %13 = sbr.rel (0) target = $region13
  $region12: #{sobel_loss.1} parent=0 // pred_region
    _
  $region13: #{sobel_loss.1} parent=0 // pred_fallthru
    _
  %v14 = vld [vmem:[%s1] sm:$0xff]
  %v15 = vld [vmem:[%s1 + $0x8] sm:$0xff]
  %v16 = vld [vmem:[%s2] sm:$0xff]
  %v17 = vld [vmem:[%s2 + $0x8] sm:$0xff]
  %v18 = vsub.f32 %v14, %v16
  %v19 = vsub.f32 %v15, %v17
  %v20 = vld [vmem:[%s0] ss:$4 sm:$0x3]
  %s21 = scalar_lea.vmem %s0, 1
  %v22 = vld [vmem:[%s21] ss:$4 sm:$0x3]
  %s23 = scalar_lea.vmem %s0, 2
  %v24 = vld [vmem:[%s23] ss:$4 sm:$0x3]
  %s25 = scalar_lea.vmem %s0, 3
  %v26 = vld [vmem:[%s25] ss:$4 sm:$0x3]
  %27 = vrot.lane.b32.xlu0 %v18, 1
  %v28 = vpop.permute.xlu0 %27
  %29 = vrot.lane.b32.xlu0 %v19, 1
  %v30 = vpop.permute.xlu0 %29
  %v31 = vlaneseq
  %v32 = vand.u32 %v31, 127
  %vm33 = vcmp.lt.s32.totalorder %v32, 1
  %v34 = vsel %vm33, %v28, %v30
  %v35 = vsel %vm33, %v30, %v28
  %v37 = vlaneseq
  %v38 = vshrl.u32 %v37, 7
  %v39 = vsub.s32 0, %v38
  %v40 = vrot.slane %v20, %v39
  %v41 = vlaneseq
  %v42 = vshrl.u32 %v41, 7
  %v43 = vsub.s32 1, %v42
  %v44 = vrot.slane %v20, %v43
  %v47 = vmul.f32 %v40, %v35
  %v48 = vmul.f32 %v44, %v34
  %49 = vrot.lane.b32.xlu0 %v18, 127
  %v50 = vpop.permute.xlu0 %49
  %51 = vrot.lane.b32.xlu0 %v19, 127
  %v52 = vpop.permute.xlu0 %51
  %vm53 = vcmp.lt.s32.totalorder %v32, 127
  %v54 = vsel %vm53, %v50, %v52
  %v55 = vsel %vm53, %v52, %v50
  %v57 = vlaneseq
  %v58 = vshrl.u32 %v57, 7
  %v59 = vsub.s32 0, %v58
  %v60 = vrot.slane %v22, %v59
  %v61 = vlaneseq
  %v62 = vshrl.u32 %v61, 7
  %v63 = vsub.s32 1, %v62
  %v64 = vrot.slane %v22, %v63
  %v67 = vmul.f32 %v60, %v54
  %v68 = vmul.f32 %v64, %v55
  %v69 = vmul.f32 %v18, 2.0
  %v70 = vmul.f32 %v19, 2.0
  %v71 = vadd.f32 %v47, %v69
  %v72 = vadd.f32 %v48, %v70
  %v73 = vadd.f32 %v71, %v67
  %v74 = vadd.f32 %v72, %v68
  %v75 = vsub.f32 %v47, %v67
  %v76 = vsub.f32 %v48, %v68
  %77 = vrot.lane.b32.xlu0 %v73, 16
  %v78 = vpop.permute.xlu0 %77
  %79 = vrot.lane.b32.xlu0 %v74, 16
  %v80 = vpop.permute.xlu0 %79
  %vm81 = vcmp.lt.s32.totalorder %v32, 16
  %v82 = vsel %vm81, %v78, %v80
  %v83 = vsel %vm81, %v80, %v78
  %v85 = vlaneseq
  %v86 = vshrl.u32 %v85, 7
  %v87 = vsub.s32 0, %v86
  %v88 = vrot.slane %v24, %v87
  %v89 = vlaneseq
  %v90 = vshrl.u32 %v89, 7
  %v91 = vsub.s32 1, %v90
  %v92 = vrot.slane %v24, %v91
  %v95 = vmul.f32 %v88, %v83
  %v96 = vmul.f32 %v92, %v82
  %97 = vrot.lane.b32.xlu0 %v73, 112
  %v98 = vpop.permute.xlu0 %97
  %99 = vrot.lane.b32.xlu0 %v74, 112
  %v100 = vpop.permute.xlu0 %99
  %vm101 = vcmp.lt.s32.totalorder %v32, 112
  %v102 = vsel %vm101, %v98, %v100
  %v103 = vsel %vm101, %v100, %v98
  %v105 = vlaneseq
  %v106 = vshrl.u32 %v105, 7
  %v107 = vsub.s32 0, %v106
  %v108 = vrot.slane %v26, %v107
  %v109 = vlaneseq
  %v110 = vshrl.u32 %v109, 7
  %v111 = vsub.s32 1, %v110
  %v112 = vrot.slane %v26, %v111
  %v115 = vmul.f32 %v108, %v102
  %v116 = vmul.f32 %v112, %v103
  %v117 = vsub.f32 %v95, %v115
  %v118 = vsub.f32 %v96, %v116
  %v119 = vand.u32 2147483647, %v117
  %v120 = vand.u32 2147483647, %v118
  %121 = vrot.lane.b32.xlu0 %v75, 16
  %v122 = vpop.permute.xlu0 %121
  %123 = vrot.lane.b32.xlu0 %v76, 16
  %v124 = vpop.permute.xlu0 %123
  %v125 = vsel %vm81, %v122, %v124
  %v126 = vsel %vm81, %v124, %v122
  %v127 = vmul.f32 %v88, %v126
  %v128 = vmul.f32 %v92, %v125
  %v129 = vmul.f32 %v75, 2.0
  %v130 = vmul.f32 %v76, 2.0
  %v131 = vadd.f32 %v127, %v129
  %v132 = vadd.f32 %v128, %v130
  %133 = vrot.lane.b32.xlu0 %v75, 112
  %v134 = vpop.permute.xlu0 %133
  %135 = vrot.lane.b32.xlu0 %v76, 112
  %v136 = vpop.permute.xlu0 %135
  %v137 = vsel %vm101, %v134, %v136
  %v138 = vsel %vm101, %v136, %v134
  %v139 = vmul.f32 %v108, %v137
  %v140 = vmul.f32 %v112, %v138
  %v141 = vadd.f32 %v131, %v139
  %v142 = vadd.f32 %v132, %v140
  %v143 = vand.u32 2147483647, %v141
  %v144 = vand.u32 2147483647, %v142
  %v145 = vadd.f32 %v119, %v143
  %v146 = vadd.f32 %v120, %v144
  %147 = vst [vmem:[%s3] sm:$0xff] %v145
  %148 = vst [vmem:[%s3 + $0x8] sm:$0xff] %v146
  // Predicated region
  $region14: #{sobel_loss.1} parent=0 // pred_check
    _
  $region15: #{sobel_loss.1} parent=0 // pred_check_branch
    %150 = sbr.rel (0) target = $region17
  $region16: #{sobel_loss.1} parent=0 // pred_region
    _
  $region17: #{sobel_loss.1} parent=0 // pred_fallthru
    _
  // Predicated region
  $region18: #{sobel_loss.1} parent=0 // pred_check
    _
  $region19: #{sobel_loss.1} parent=0 // pred_check_branch
    %152 = sbr.rel (0) target = $region21
  $region20: #{sobel_loss.1} parent=0 // pred_region
    _
  $region21: #{sobel_loss.1} parent=0 // pred_fallthru
    _

</llo_original>
